<compile_context>
chip_gen: v5e
topology: v5e:2x2
jax: 0.10.0
libtpu: 0.0.40
codegen_flags: <defaults>
</compile_context>

<pallas_src>
import functools

import jax
import jax.numpy as jnp
from jax.experimental import pallas as pl
from jax.experimental.pallas import tpu as pltpu

NEG_INF = 1e38  # matches the PyTorch code's `Inf = 1e+38`


# --------------------------------------------------------------------------
# Kernel: one (batch-tile, Hout-tile, expert-slot) grid step.
# --------------------------------------------------------------------------
def _sgmoe_kernel(ids_ref, nact_ref, x_ref, gcol_ref, g_ref, we_ref, be_ref,
                  out_ref, *acc_scr, n_slots):
    """acc_scr is empty when the output dtype is f32 (accumulate straight into
    the resident out_ref block); otherwise a single (tb, tn) f32 VMEM scratch.
    """
    b = pl.program_id(0)
    s = pl.program_id(2)
    acc_ref = acc_scr[0] if acc_scr else out_ref

    # slot 0: init the accumulator with the gate-weighted expert biases.
    # G is exactly 0 for experts no token in this tile routed to, so the tiny
    # (tb, E) @ (E, tn) matmul folds in only the routed biases.
    @pl.when(s == 0)
    def _init():
        acc_ref[...] = jnp.dot(g_ref[...], be_ref[...],
                               preferred_element_type=jnp.float32)

    # active slots: acc += gate_col * (x @ We[ids[b, s]]).  Padded slots
    # (s >= n_active) repeat the previous expert id, so the pipeline does not
    # re-DMA weights for them; skip their compute entirely.
    @pl.when(s < nact_ref[b])
    def _expert():
        y = jnp.dot(x_ref[...], we_ref[...],
                    preferred_element_type=jnp.float32)        # (tb, tn) f32
        acc_ref[...] += gcol_ref[...] * y                      # (tb,1)*(tb,tn)

    # finalize only when the accumulator is a separate f32 scratch (bf16 out).
    if acc_scr:
        @pl.when(s == n_slots - 1)
        def _finalize():
            out_ref[...] = acc_ref[...].astype(out_ref.dtype)


# --------------------------------------------------------------------------
# Wrapper-side gating (Eq. 3-5) and per-tile routing metadata (plain JAX).
# --------------------------------------------------------------------------
def _gating(x, Wg, bg, Wn, bn, noise, top_k):
    """Dense gate matrix G (B, E), f32, exactly 0 for un-routed experts."""
    x32 = x.astype(jnp.float32)
    g = x32 @ Wg.astype(jnp.float32) + bg.astype(jnp.float32)
    sp = jax.nn.softplus(x32 @ Wn.astype(jnp.float32) + bn.astype(jnp.float32))
    H = g + noise.astype(jnp.float32) * sp                      # (B, E)
    # top_k largest logits (torch.topk-style; ties resolved by index order).
    # Softmax over the top-k values == softmax over the -1e38-masked logits.
    topv, topi = jax.lax.top_k(H, top_k)                        # (B, k)
    w = jax.nn.softmax(topv, axis=-1)
    B, E = H.shape
    G = jnp.zeros((B, E), jnp.float32)
    G = G.at[jnp.arange(B)[:, None], topi].set(w)
    return G


def _routing(G, tb, top_k):
    """Per-batch-tile compaction of routed ('active') expert ids.

    Returns (ids_flat, n_active, gcol, n_slots):
      ids_flat : (n_tiles * n_slots,) int32; slot s of tile b holds the s-th
                 active expert id, padded by repeating the last active id,
      n_active : (n_tiles,) int32 number of active experts per tile (>= 1),
      gcol     : (n_tiles, n_slots, tb, 1) f32 gate column per (tile, slot).
    """
    B, E = G.shape
    n_tiles = B // tb
    n_slots = min(E, tb * top_k)
    Gt = G.reshape(n_tiles, tb, E)
    active = (Gt > 0.0).any(axis=1)                             # (n_tiles, E)
    n_active = jnp.sum(active, axis=1).astype(jnp.int32)
    order = jnp.argsort(jnp.where(active, 0, 1), axis=1)        # active ids first
    slot = jnp.minimum(jnp.arange(n_slots)[None, :], n_active[:, None] - 1)
    ids = jnp.take_along_axis(order, slot, axis=1).astype(jnp.int32)
    gcol = jnp.take_along_axis(Gt, ids[:, None, :], axis=2)     # (nt, tb, ns)
    gcol = jnp.transpose(gcol, (0, 2, 1))[..., None]            # (nt, ns, tb, 1)
    return ids.reshape(-1), n_active, gcol, n_slots


def _pick_tile(total, prefer, quantum):
    """Largest divisor of `total` that is <= prefer and a multiple of
    `quantum`; falls back to `total` itself."""
    cand = (min(prefer, total) // quantum) * quantum
    while cand >= quantum:
        if total % cand == 0:
            return cand
        cand -= quantum
    return total


# --------------------------------------------------------------------------
# Public entry point.
# --------------------------------------------------------------------------
def sgmoe_forward(x, Wg, bg, Wn, bn, noise, We, be, *, top_k, tb=None, tn=None,
                  matmul_dtype=jnp.bfloat16):
    """x: (B, D); Wg/Wn: (D, E); bg/bn/noise: (1, E); We: (E, D, H); be: (E, 1, H).

    matmul_dtype: dtype for the expert matmul operands (x, We).  Accumulation,
    gating, softmax and biases are always f32.  None keeps x.dtype.
    """
    B, D = x.shape
    E, _, Hout = We.shape
    assert 1 <= top_k <= E, "top_k must be in [1, nexperts]"

    # Production defaults: large batch tile (256) for arithmetic intensity,
    # Hout tile of <=512 so double-buffered We blocks fit v7x VMEM.
    if tb is None:
        tb = _pick_tile(B, prefer=256, quantum=8)
    if tn is None:
        tn = _pick_tile(Hout, prefer=512, quantum=128)
    assert B % tb == 0 and (tb % 8 == 0 or tb == B)
    assert Hout % tn == 0 and (tn % 128 == 0 or tn == Hout)

    out_dtype = x.dtype
    mm_dtype = x.dtype if matmul_dtype is None else matmul_dtype

    # Gating + routing metadata in plain JAX (f32, exact top-k selection).
    G = _gating(x, Wg, bg, Wn, bn, noise, top_k)                # (B, E) f32
    ids_flat, n_active, gcol, n_slots = _routing(G, tb, top_k)

    be_stacked = be.reshape(E, Hout).astype(jnp.float32)        # (E, Hout)
    x_mm = x.astype(mm_dtype)
    We_mm = We.astype(mm_dtype)

    n_btiles = B // tb
    n_htiles = Hout // tn
    acc_in_out = jnp.dtype(out_dtype) == jnp.dtype(jnp.float32)
    scratch = [] if acc_in_out else [pltpu.VMEM((tb, tn), jnp.float32)]

    # Size the scoped VMEM to the actual (double-buffered) tiles + headroom.
    mm_bytes = jnp.dtype(mm_dtype).itemsize
    vmem_needed = (2 * tb * D * mm_bytes                 # x tile
                   + 2 * D * tn * mm_bytes               # We[e] tile
                   + 2 * tb * tn * jnp.dtype(out_dtype).itemsize   # out tile
                   + 2 * (tb * E + E * tn + tb) * 4      # G, be, gcol
                   + (0 if acc_in_out else tb * tn * 4))
    vmem_limit = int(min(max(2 * vmem_needed, 32 * 2**20), 64 * 2**20))

    kernel = functools.partial(_sgmoe_kernel, n_slots=n_slots)
    return pl.pallas_call(
        kernel,
        out_shape=jax.ShapeDtypeStruct((B, Hout), out_dtype),
        grid_spec=pltpu.PrefetchScalarGridSpec(
            num_scalar_prefetch=2,                # ids_flat, n_active -> SMEM
            # batch tiles x Hout tiles: "parallel" (megacore-shardable on v7x;
            # keep n_btiles >= 2 there); expert slots last: "arbitrary"
            # reduction axis with a resident output/accumulator block.
            grid=(n_btiles, n_htiles, n_slots),
            in_specs=[
                pl.BlockSpec((tb, D), lambda b, j, s, ids, na: (b, 0)),
                pl.BlockSpec((None, None, tb, 1),
                             lambda b, j, s, ids, na: (b, s, 0, 0)),
                pl.BlockSpec((tb, E), lambda b, j, s, ids, na: (b, 0)),
                # routed expert weights: data-dependent block index from SMEM;
                # padded slots repeat the previous id -> no extra DMA.
                pl.BlockSpec((None, D, tn),
                             lambda b, j, s, ids, na:
                             (ids[b * n_slots + s], 0, j)),
                pl.BlockSpec((E, tn), lambda b, j, s, ids, na: (0, j)),
            ],
            out_specs=pl.BlockSpec((tb, tn), lambda b, j, s, ids, na: (b, j)),
            scratch_shapes=scratch,
        ),
        compiler_params=pltpu.CompilerParams(
            dimension_semantics=("parallel", "parallel", "arbitrary"),
            vmem_limit_bytes=vmem_limit),
    )(ids_flat, n_active, x_mm, gcol, G, We_mm, be_stacked)


# --------------------------------------------------------------------------
# Pure-JAX reference replicating the PyTorch forward semantics.
# --------------------------------------------------------------------------
def _reference(x, Wg, bg, Wn, bn, noise, We, be, top_k):
    g = x @ Wg + bg
    sp = jax.nn.softplus(x @ Wn + bn)
    H = g + noise * sp
    E = We.shape[0]
    if top_k < E:
        # torch.topk(largest=False, k=E-top_k) -> scatter -Inf
        _, drop = jax.lax.top_k(-H, E - top_k)
        H = H.at[jnp.arange(H.shape[0])[:, None], drop].set(-NEG_INF)
    G = jax.nn.softmax(H, axis=1)
    Ey = jnp.stack([x @ We[ei] + be[ei, 0] for ei in range(E)], axis=1)
    return jnp.sum(G[:, :, None] * Ey, axis=1)


if __name__ == "__main__":
    def make_inputs(key, B, D, Hout, E):
        ks = jax.random.split(key, 8)
        x = jax.random.normal(ks[0], (B, D), dtype=jnp.float32)
        Wg = jax.random.normal(ks[1], (D, E), dtype=jnp.float32) / jnp.sqrt(D)
        bg = jax.random.normal(ks[2], (1, E), dtype=jnp.float32) * 0.1
        Wn = jax.random.normal(ks[3], (D, E), dtype=jnp.float32) / jnp.sqrt(D)
        bn = jax.random.normal(ks[4], (1, E), dtype=jnp.float32) * 0.1
        We = jax.random.normal(ks[5], (E, D, Hout), dtype=jnp.float32) / jnp.sqrt(D)
        be = jax.random.normal(ks[6], (E, 1, Hout), dtype=jnp.float32) * 0.1
        # torch.randn(nexperts): one noise vector shared across the batch;
        # sampled outside the kernel for determinism (the PyTorch module
        # samples it inside forward()).
        noise = jax.random.normal(ks[7], (1, E), dtype=jnp.float32)
        return x, Wg, bg, Wn, bn, We, be, noise

    # --- test 1: f32 matmuls; 2 batch tiles x 2 Hout tiles x 8 expert slots --
    B, D, Hout, E, TOP_K = 64, 128, 256, 8, 2
    x, Wg, bg, Wn, bn, We, be, noise = make_inputs(jax.random.PRNGKey(0),
                                                   B, D, Hout, E)
    out = sgmoe_forward(x, Wg, bg, Wn, bn, noise, We, be, top_k=TOP_K,
                        tb=32, tn=128, matmul_dtype=jnp.float32)
    out = jax.block_until_ready(out)
    ref = _reference(x, Wg, bg, Wn, bn, noise, We, be, TOP_K)
    assert out.shape == (B, Hout)
    assert jnp.allclose(out, ref, atol=2e-3, rtol=2e-3), "f32 mismatch vs reference"

    # --- test 2: default bf16 matmuls; exercises the routing-skip path -------
    # (tb=8 here only to force some experts inactive per tile at toy scale;
    #  production tiles should be 128-256 rows.)
    B2, D2, H2, E2, K2 = 32, 128, 128, 8, 1
    x2, Wg2, bg2, Wn2, bn2, We2, be2, noise2 = make_inputs(
        jax.random.PRNGKey(1), B2, D2, H2, E2)
    out2 = sgmoe_forward(x2, Wg2, bg2, Wn2, bn2, noise2, We2, be2, top_k=K2,
                         tb=8, tn=128)
    out2 = jax.block_until_ready(out2)
    ref2 = _reference(x2, Wg2, bg2, Wn2, bn2, noise2, We2, be2, K2)
    assert jnp.allclose(out2, ref2, atol=5e-2, rtol=5e-2), "bf16 mismatch vs reference"

    print("KERNEL_OK")
</pallas_src>

<mosaic_0001>
module attributes {stable_mosaic.version = 11 : i64} {
  func.func @_sgmoe_kernel(%arg0: i32, %arg1: i32, %arg2: i32, %arg3: memref<16xi32, #tpu.memory_space<smem>>, %arg4: memref<2xi32, #tpu.memory_space<smem>>, %arg5: memref<32x128xf32, #tpu.memory_space<vmem>>, %arg6: memref<1x1x32x1xf32, #tpu.memory_space<vmem>>, %arg7: memref<32x8xf32, #tpu.memory_space<vmem>>, %arg8: memref<1x128x128xf32, #tpu.memory_space<vmem>>, %arg9: memref<8x128xf32, #tpu.memory_space<vmem>>, %arg10: memref<32x128xf32, #tpu.memory_space<vmem>>) attributes {dimension_semantics = [#tpu.dimension_semantics<parallel>, #tpu.dimension_semantics<parallel>, #tpu.dimension_semantics<arbitrary>], iteration_bounds = array<i64: 2, 2, 8>, scalar_prefetch = 2 : i64, scratch_operands = 0 : i64, tpu.core_type = #tpu.core_type<tc>, window_params = [{transform_indices = @transform_0, window_bounds = array<i64: 32, 128>}, {transform_indices = @transform_1, window_bounds = array<i64: 1, 1, 32, 1>}, {transform_indices = @transform_2, window_bounds = array<i64: 32, 8>}, {transform_indices = @transform_3, window_bounds = array<i64: 1, 128, 128>}, {transform_indices = @transform_4, window_bounds = array<i64: 8, 128>}, {transform_indices = @transform_5, window_bounds = array<i64: 32, 128>}]} {
    %c0_i32 = arith.constant 0 : i32
    %0 = arith.cmpi eq, %arg2, %c0_i32 : i32
    %1 = arith.extui %0 : i1 to i32
    %c0_i32_0 = arith.constant 0 : i32
    %2 = arith.cmpi ne, %1, %c0_i32_0 : i32
    scf.if %2 {
      %c0 = arith.constant 0 : index
      %c0_2 = arith.constant 0 : index
      %8 = vector.load %arg7[%c0, %c0_2] : memref<32x8xf32, #tpu.memory_space<vmem>>, vector<32x8xf32>
      %c0_3 = arith.constant 0 : index
      %c0_4 = arith.constant 0 : index
      %9 = vector.load %arg9[%c0_3, %c0_4] : memref<8x128xf32, #tpu.memory_space<vmem>>, vector<8x128xf32>
      %cst = arith.constant dense<0.000000e+00> : vector<32x128xf32>
      %10 = tpu.matmul %8, %9, %cst {dimension_numbers = #tpu.dot_dimension_numbers<[1], [0], [0], [1], [0, 0, 1, 1], [], []>} : vector<32x8xf32>, vector<8x128xf32>, vector<32x128xf32> -> vector<32x128xf32>
      %c0_5 = arith.constant 0 : index
      %c0_6 = arith.constant 0 : index
      %11 = vector.load %arg10[%c0_5, %c0_6] : memref<32x128xf32, #tpu.memory_space<vmem>>, vector<32x128xf32>
      tpu.vector_store %arg10[%c0_5, %c0_6], %10 {strides = array<i32>} : memref<32x128xf32, #tpu.memory_space<vmem>>, vector<32x128xf32>,
    } else {
    }
    %3 = arith.index_cast %arg0 : i32 to index
    %4 = memref.load %arg4[%3] : memref<2xi32, #tpu.memory_space<smem>>
    %5 = arith.cmpi slt, %arg2, %4 : i32
    %6 = arith.extui %5 : i1 to i32
    %c0_i32_1 = arith.constant 0 : i32
    %7 = arith.cmpi ne, %6, %c0_i32_1 : i32
    scf.if %7 {
      %c0 = arith.constant 0 : index
      %c0_2 = arith.constant 0 : index
      %8 = vector.load %arg5[%c0, %c0_2] : memref<32x128xf32, #tpu.memory_space<vmem>>, vector<32x128xf32>
      %c0_3 = arith.constant 0 : index
      %c0_4 = arith.constant 0 : index
      %c0_5 = arith.constant 0 : index
      %9 = vector.load %arg8[%c0_3, %c0_4, %c0_5] : memref<1x128x128xf32, #tpu.memory_space<vmem>>, vector<1x128x128xf32>
      %10 = vector.shape_cast %9 : vector<1x128x128xf32> to vector<128x128xf32>
      %cst = arith.constant dense<0.000000e+00> : vector<32x128xf32>
      %11 = tpu.matmul %8, %10, %cst {dimension_numbers = #tpu.dot_dimension_numbers<[1], [0], [0], [1], [0, 0, 1, 1], [], []>} : vector<32x128xf32>, vector<128x128xf32>, vector<32x128xf32> -> vector<32x128xf32>
      %c0_6 = arith.constant 0 : index
      %c0_7 = arith.constant 0 : index
      %12 = vector.load %arg10[%c0_6, %c0_7] : memref<32x128xf32, #tpu.memory_space<vmem>>, vector<32x128xf32>
      %c0_8 = arith.constant 0 : index
      %c0_9 = arith.constant 0 : index
      %c0_10 = arith.constant 0 : index
      %c0_11 = arith.constant 0 : index
      %13 = vector.load %arg6[%c0_8, %c0_9, %c0_10, %c0_11] : memref<1x1x32x1xf32, #tpu.memory_space<vmem>>, vector<1x1x32x1xf32>
      %14 = vector.shape_cast %13 : vector<1x1x32x1xf32> to vector<32x1xf32>
      %15 = vector.broadcast %14 : vector<32x1xf32> to vector<32x128xf32>
      %16 = arith.mulf %15, %11 : vector<32x128xf32>
      %17 = arith.addf %12, %16 : vector<32x128xf32>
      %c0_12 = arith.constant 0 : index
      %c0_13 = arith.constant 0 : index
      %18 = vector.load %arg10[%c0_12, %c0_13] : memref<32x128xf32, #tpu.memory_space<vmem>>, vector<32x128xf32>
      tpu.vector_store %arg10[%c0_12, %c0_13], %17 {strides = array<i32>} : memref<32x128xf32, #tpu.memory_space<vmem>>, vector<32x128xf32>,
    } else {
    }
    return
  }
  func.func @transform_0(%arg0: i32, %arg1: i32, %arg2: i32, %arg3: memref<16xi32, #tpu.memory_space<smem>>, %arg4: memref<2xi32, #tpu.memory_space<smem>>) -> (i32, i32) {
    %c0_i32 = arith.constant 0 : i32
    %c0_i32_0 = arith.constant 0 : i32
    return %arg0, %c0_i32 : i32, i32
  }
  func.func @transform_1(%arg0: i32, %arg1: i32, %arg2: i32, %arg3: memref<16xi32, #tpu.memory_space<smem>>, %arg4: memref<2xi32, #tpu.memory_space<smem>>) -> (i32, i32, i32, i32) {
    %c0_i32 = arith.constant 0 : i32
    %c0_i32_0 = arith.constant 0 : i32
    %c0_i32_1 = arith.constant 0 : i32
    return %arg0, %arg2, %c0_i32, %c0_i32_0 : i32, i32, i32, i32
  }
  func.func @transform_2(%arg0: i32, %arg1: i32, %arg2: i32, %arg3: memref<16xi32, #tpu.memory_space<smem>>, %arg4: memref<2xi32, #tpu.memory_space<smem>>) -> (i32, i32) {
    %c0_i32 = arith.constant 0 : i32
    %c0_i32_0 = arith.constant 0 : i32
    return %arg0, %c0_i32 : i32, i32
  }
  func.func @transform_3(%arg0: i32, %arg1: i32, %arg2: i32, %arg3: memref<16xi32, #tpu.memory_space<smem>>, %arg4: memref<2xi32, #tpu.memory_space<smem>>) -> (i32, i32, i32) {
    %c8_i32 = arith.constant 8 : i32
    %0 = arith.muli %arg0, %c8_i32 : i32
    %1 = arith.addi %0, %arg2 : i32
    %2 = arith.index_cast %1 : i32 to index
    %3 = memref.load %arg3[%2] : memref<16xi32, #tpu.memory_space<smem>>
    %c0_i32 = arith.constant 0 : i32
    %c0_i32_0 = arith.constant 0 : i32
    return %3, %c0_i32, %arg1 : i32, i32, i32
  }
  func.func @transform_4(%arg0: i32, %arg1: i32, %arg2: i32, %arg3: memref<16xi32, #tpu.memory_space<smem>>, %arg4: memref<2xi32, #tpu.memory_space<smem>>) -> (i32, i32) {
    %c0_i32 = arith.constant 0 : i32
    %c0_i32_0 = arith.constant 0 : i32
    return %c0_i32, %arg1 : i32, i32
  }
  func.func @transform_5(%arg0: i32, %arg1: i32, %arg2: i32, %arg3: memref<16xi32, #tpu.memory_space<smem>>, %arg4: memref<2xi32, #tpu.memory_space<smem>>) -> (i32, i32) {
    %c0_i32 = arith.constant 0 : i32
    return %arg0, %arg1 : i32, i32
  }
}

</mosaic_0001>

<llo_original>
// kernel: tpu_custom_call.1
$region0: #{tpu_custom_call.1}
  #allocation0 [shape = 'u32[]', space=smem, size = 0x4, offset = 0x4, fixed_abs, tag = 'smem constant byte address 0x4 - core index']
  #allocation1 [shape = 'u32[72,128]{1,0:T(1,128)}', space=vmem, size = 0x9000, scoped, tag = 'internal scratch']
  #allocation2 [shape = 's32[1]{0}', space=sflag, size = 0x4, scoped, tag = 'scoped memory for tpu_custom_call.1']
  #allocation3 [shape = 'u8[512]{0}', space=smem, size = 0x200, scoped, tag = 'prefetched SMEM operand 0']
  #allocation4 [shape = 'u8[512]{0}', space=smem, size = 0x200, scoped, tag = 'prefetched SMEM operand 1']
  %s0 = inlined_call_operand.vmem [shape: s32[16], index: 0, kind: input, shape index: {}]
  %s1 = inlined_call_operand.vmem [shape: s32[2], index: 1, kind: input, shape index: {}]
  %s2 = inlined_call_operand.vmem [shape: f32[64,128], index: 2, kind: input, shape index: {}]
  %s3 = inlined_call_operand.vmem [shape: f32[2,8,32,1], index: 3, kind: input, shape index: {}]
  %s4 = inlined_call_operand.vmem [shape: f32[64,8], index: 4, kind: input, shape index: {}]
  %s5 = inlined_call_operand.hbm [shape: f32[8,128,256], index: 5, kind: input, shape index: {}]
  %s6 = inlined_call_operand.vmem [shape: f32[8,256], index: 6, kind: input, shape index: {}]
  %s7 = inlined_call_operand.hbm [shape: f32[64,256], index: 7, kind: output, shape index: {}]
  %s8 = sld [smem:[#allocation0]]
  $region65: #{tpu_custom_call.1} parent=0
    _
  %s10 = ssub.s32 1, %s8
  %s11 = scalar_select 0, %s10, %s8
  %s13 = sshll.u32 %s0, 4
  %s14 = int_to_ptr.vmem [resolvable:$true] %s13
  %16 = dma.vmem_to_smem %s14, 16, [#allocation3], [#allocation2]
  %s18 = sshll.u32 %s1, 4
  %s19 = int_to_ptr.vmem [resolvable:$true] %s18
  %21 = dma.vmem_to_smem %s19, 16, [#allocation4], [#allocation2]
  %23 = dma.done [#allocation2], 32
  %24 = sfence
  $region1: #{tpu_custom_call.1} parent=0
    #allocation5 [shape = 'u8[131072]{0}', space=vmem, size = 0x20000, scoped, tag = 'input window, operand 5']
    #allocation6 [shape = 's32[2]{0}', space=sflag, size = 0x8, scoped, tag = 'scoped memory for tpu_custom_call.1']
    #allocation7 [shape = 's32[2]{0}', space=sflag, size = 0x8, scoped, tag = 'scoped memory for tpu_custom_call.1']
    #allocation8 [shape = 'u8[32768]{0}', space=vmem, size = 0x8000, scoped, tag = 'output window, operand 0']
    %25 = vsyncpa [#allocation6], 0
    %s26 = scalar_lea.sflag [#allocation6], 1
    %27 = vsyncpa %s26, 0
    %28 = vsyncpa [#allocation7], 0
    %s29 = scalar_lea.sflag [#allocation7], 1
    %30 = vsyncpa %s29, 0
    loop: start=0, step=1, limit=34
    $region2: #{tpu_custom_call.1} parent=1 // loop_pre_header
      _
    $region3: #{tpu_custom_call.1} parent=1 // loop_header
      %s32 = sphi 0, %s36
      %p33 = scmp.ge.s32.totalorder %s32, 34
      %s39 = sphi 0, %s58
      %s40 = sphi 0, %s54
      %s41 = sphi 0, %s50
      %s42 = sphi 0, %s39
      %s43 = sphi 0, %s40
      %s44 = sphi 0, %s41
      %s45 = sphi 0, %s42
      %s46 = sphi 0, %s43
      %s47 = sphi 0, %s44
      %s61 = sphi 0, %s63
      %s64 = sphi 0, %s61
      %s65 = sphi 0, %s64
      %s81 = sphi 0, %s65
      %s89 = sphi 0, %s91
      %s92 = sphi 0, %s89
      %s93 = sphi 0, %s92
      %s109 = sphi 0, %s93
      %s115 = sphi 0, %s117
      %s118 = sphi 0, %s115
      %s119 = sphi 0, %s118
      %s135 = sphi 0, %s119
      %s149 = sphi 0, %s151
      %s152 = sphi 0, %s149
      %s153 = sphi 0, %s152
      %s169 = sphi 0, %s153
      %s175 = sphi 0, %s177
      %s178 = sphi 0, %s175
      %s179 = sphi 0, %s178
      %s195 = sphi 0, %s179
      %s203 = sphi 0, %s205
      %s206 = sphi 0, %s203
      %s207 = sphi 0, %s206
      %s223 = sphi 0, %s207
    $region4: #{tpu_custom_call.1} parent=1 // loop_header_branch
      %35 = sbr.rel (%p33) target = $region8
    $region5: #{tpu_custom_call.1} parent=1 // loop_body
      %s37 = ssub.s32 %s32, 1
      %s38 = ssub.s32 %s32, 2
      %s48 = sadd.s32 1, %s41
      %p49 = scmp.ge.s32.totalorder %s48, 8
      %s50 = scalar_select %p49, 0, %s48
      %s51 = sadd.s32 1, %s40
      %s52 = scalar_select %p49, %s51, %s40
      %p53 = scmp.ge.s32.totalorder %s52, 2
      %s54 = scalar_select %p53, 0, %s52
      %s55 = sadd.s32 1, %s39
      %s56 = scalar_select %p53, %s55, %s39
      %p57 = scmp.ge.s32.totalorder %s56, 2
      %s58 = scalar_select %p57, 0, %s56
      %s59 = ssub.s32 %s39, %s58
      %p60 = scmp.eq.s32.totalorder %s59, 0
      %s62 = sadd.s32 %s61, 1
      %s63 = scalar_select %p60, %s61, %s62
      %p66 = pneg %p60
      %p67 = scmp.eq.s32.totalorder %s32, 31
      %p68 = por %p66, %p67
      %p69 = scmp.ne.s32.totalorder %s61, %s64
      %p70 = scmp.eq.s32.totalorder %s32, 0
      %p71 = por %p69, %p70
      %p72 = scmp.ne.s32.totalorder %s61, %s64
      %p73 = scmp.eq.s32.totalorder %s37, 31
      %p74 = por %p72, %p73
      %p75 = scmp.ne.s32.totalorder %s64, %s65
      %p76 = scmp.eq.s32.totalorder %s37, 0
      %p77 = por %p75, %p76
      %p78 = scmp.ne.s32.totalorder %s64, %s65
      %p79 = scmp.eq.s32.totalorder %s38, 31
      %p80 = por %p78, %p79
      %p82 = scmp.ne.s32.totalorder %s65, %s81
      %p83 = scmp.eq.s32.totalorder %s38, 0
      %p84 = por %p82, %p83
      %s85 = ssub.s32 %s39, %s58
      %s86 = ssub.s32 %s41, %s50
      %s87 = sor.u32 %s85, %s86
      %p88 = scmp.eq.s32.totalorder %s87, 0
      %s90 = sadd.s32 %s89, 1
      %s91 = scalar_select %p88, %s89, %s90
      %p94 = pneg %p88
      %p95 = scmp.eq.s32.totalorder %s32, 31
      %p96 = por %p94, %p95
      %p97 = scmp.ne.s32.totalorder %s89, %s92
      %p98 = scmp.eq.s32.totalorder %s32, 0
      %p99 = por %p97, %p98
      %p100 = scmp.ne.s32.totalorder %s89, %s92
      %p101 = scmp.eq.s32.totalorder %s37, 31
      %p102 = por %p100, %p101
      %p103 = scmp.ne.s32.totalorder %s92, %s93
      %p104 = scmp.eq.s32.totalorder %s37, 0
      %p105 = por %p103, %p104
      %p106 = scmp.ne.s32.totalorder %s92, %s93
      %p107 = scmp.eq.s32.totalorder %s38, 31
      %p108 = por %p106, %p107
      %p110 = scmp.ne.s32.totalorder %s93, %s109
      %p111 = scmp.eq.s32.totalorder %s38, 0
      %p112 = por %p110, %p111
      %s113 = ssub.s32 %s39, %s58
      %p114 = scmp.eq.s32.totalorder %s113, 0
      %s116 = sadd.s32 %s115, 1
      %s117 = scalar_select %p114, %s115, %s116
      %p120 = pneg %p114
      %p121 = scmp.eq.s32.totalorder %s32, 31
      %p122 = por %p120, %p121
      %p123 = scmp.ne.s32.totalorder %s115, %s118
      %p124 = scmp.eq.s32.totalorder %s32, 0
      %p125 = por %p123, %p124
      %p126 = scmp.ne.s32.totalorder %s115, %s118
      %p127 = scmp.eq.s32.totalorder %s37, 31
      %p128 = por %p126, %p127
      %p129 = scmp.ne.s32.totalorder %s118, %s119
      %p130 = scmp.eq.s32.totalorder %s37, 0
      %p131 = por %p129, %p130
      %p132 = scmp.ne.s32.totalorder %s118, %s119
      %p133 = scmp.eq.s32.totalorder %s38, 31
      %p134 = por %p132, %p133
      %p136 = scmp.ne.s32.totalorder %s119, %s135
      %p137 = scmp.eq.s32.totalorder %s38, 0
      %p138 = por %p136, %p137
      %s139 = smul.u32 %s39, 8
      %s140 = sadd.s32 %s139, %s41
      %s141 = sld [smem:[#allocation3 + %s140]]
      %s142 = smul.u32 %s58, 8
      %s143 = sadd.s32 %s142, %s50
      %s144 = sld [smem:[#allocation3 + %s143]]
      %s145 = ssub.s32 %s141, %s144
      %s146 = ssub.s32 %s40, %s54
      %s147 = sor.u32 %s145, %s146
      %p148 = scmp.eq.s32.totalorder %s147, 0
      %s150 = sadd.s32 %s149, 1
      %s151 = scalar_select %p148, %s149, %s150
      %p154 = pneg %p148
      %p155 = scmp.eq.s32.totalorder %s32, 31
      %p156 = por %p154, %p155
      %p157 = scmp.ne.s32.totalorder %s149, %s152
      %p158 = scmp.eq.s32.totalorder %s32, 0
      %p159 = por %p157, %p158
      %p160 = scmp.ne.s32.totalorder %s149, %s152
      %p161 = scmp.eq.s32.totalorder %s37, 31
      %p162 = por %p160, %p161
      %p163 = scmp.ne.s32.totalorder %s152, %s153
      %p164 = scmp.eq.s32.totalorder %s37, 0
      %p165 = por %p163, %p164
      %p166 = scmp.ne.s32.totalorder %s152, %s153
      %p167 = scmp.eq.s32.totalorder %s38, 31
      %p168 = por %p166, %p167
      %p170 = scmp.ne.s32.totalorder %s153, %s169
      %p171 = scmp.eq.s32.totalorder %s38, 0
      %p172 = por %p170, %p171
      %s173 = ssub.s32 %s40, %s54
      %p174 = scmp.eq.s32.totalorder %s173, 0
      %s176 = sadd.s32 %s175, 1
      %s177 = scalar_select %p174, %s175, %s176
      %p180 = pneg %p174
      %p181 = scmp.eq.s32.totalorder %s32, 31
      %p182 = por %p180, %p181
      %p183 = scmp.ne.s32.totalorder %s175, %s178
      %p184 = scmp.eq.s32.totalorder %s32, 0
      %p185 = por %p183, %p184
      %p186 = scmp.ne.s32.totalorder %s175, %s178
      %p187 = scmp.eq.s32.totalorder %s37, 31
      %p188 = por %p186, %p187
      %p189 = scmp.ne.s32.totalorder %s178, %s179
      %p190 = scmp.eq.s32.totalorder %s37, 0
      %p191 = por %p189, %p190
      %p192 = scmp.ne.s32.totalorder %s178, %s179
      %p193 = scmp.eq.s32.totalorder %s38, 31
      %p194 = por %p192, %p193
      %p196 = scmp.ne.s32.totalorder %s179, %s195
      %p197 = scmp.eq.s32.totalorder %s38, 0
      %p198 = por %p196, %p197
      %s199 = ssub.s32 %s39, %s58
      %s200 = ssub.s32 %s40, %s54
      %s201 = sor.u32 %s199, %s200
      %p202 = scmp.eq.s32.totalorder %s201, 0
      %s204 = sadd.s32 %s203, 1
      %s205 = scalar_select %p202, %s203, %s204
      %p208 = pneg %p202
      %p209 = scmp.eq.s32.totalorder %s32, 31
      %p210 = por %p208, %p209
      %p211 = scmp.ne.s32.totalorder %s203, %s206
      %p212 = scmp.eq.s32.totalorder %s32, 0
      %p213 = por %p211, %p212
      %p214 = scmp.ne.s32.totalorder %s203, %s206
      %p215 = scmp.eq.s32.totalorder %s37, 31
      %p216 = por %p214, %p215
      %p217 = scmp.ne.s32.totalorder %s206, %s207
      %p218 = scmp.eq.s32.totalorder %s37, 0
      %p219 = por %p217, %p218
      %p220 = scmp.ne.s32.totalorder %s206, %s207
      %p221 = scmp.eq.s32.totalorder %s38, 31
      %p222 = por %p220, %p221
      %p224 = scmp.ne.s32.totalorder %s207, %s223
      %p225 = scmp.eq.s32.totalorder %s38, 0
      %p226 = por %p224, %p225
      %p227 = scmp.le.s32.totalorder 1, %s32
      %p228 = scmp.lt.s32.totalorder %s32, 33
      %p229 = pnand %p227, %p228
      %p230 = pneg %p229
      // Predicated region
      $region9: #{tpu_custom_call.1} parent=5 // pred_check
        _
      $region10: #{tpu_custom_call.1} parent=5 // pred_check_branch
        %232 = sbr.rel (%p229) target = $region12
      $region11: #{tpu_custom_call.1} parent=5 // pred_region
        %s233 = ssub.s32 %s32, 1
      $region12: #{tpu_custom_call.1} parent=5 // pred_fallthru
        _
      %p234 = scmp.lt.s32.totalorder %s32, 32
      // Predicated region
      $region13: #{tpu_custom_call.1} parent=5 // pred_check
        %p235 = pneg %p234
      $region14: #{tpu_custom_call.1} parent=5 // pred_check_branch
        %237 = sbr.rel (%p235) target = $region16
      $region15: #{tpu_custom_call.1} parent=5 // pred_region
        // Predicated region
        $region17: #{tpu_custom_call.1} parent=15 // pred_check
          %p238 = pneg %p71
        $region18: #{tpu_custom_call.1} parent=15 // pred_check_branch
          %240 = sbr.rel (%p238) target = $region20
        $region19: #{tpu_custom_call.1} parent=15 // pred_region
          %s241 = smul.u32 4, %s39
          %p242 = scmp.lt.s32.totalorder %s241, 7
          %s243 = scalar_select %p242, %s241, 7
          %s244 = smul.addr %s243, 8
          %s245 = scalar_lea.vmem %s2, %s244
          %s246 = smul.u32 4, %s39
        $region20: #{tpu_custom_call.1} parent=15 // pred_fallthru
          _
        // Predicated region
        $region21: #{tpu_custom_call.1} parent=15 // pred_check
          %p247 = pneg %p99
        $region22: #{tpu_custom_call.1} parent=15 // pred_check_branch
          %249 = sbr.rel (%p247) target = $region24
        $region23: #{tpu_custom_call.1} parent=15 // pred_region
          %p250 = scmp.lt.s32.totalorder %s39, 1
          %s251 = scalar_select %p250, %s39, 1
          %p252 = scmp.lt.s32.totalorder %s41, 7
          %s253 = scalar_select %p252, %s41, 7
          %s254 = smul.addr %s253, 4
          %s255 = smul.addr %s251, 32
          %s256 = sadd.s32 %s254, %s255
          %s257 = smul.addr %s256, 8
          %s258 = scalar_lea.vmem %s3, %s257
        $region24: #{tpu_custom_call.1} parent=15 // pred_fallthru
          _
        // Predicated region
        $region25: #{tpu_custom_call.1} parent=15 // pred_check
          %p259 = pneg %p125
        $region26: #{tpu_custom_call.1} parent=15 // pred_check_branch
          %261 = sbr.rel (%p259) target = $region28
        $region27: #{tpu_custom_call.1} parent=15 // pred_region
          %s262 = smul.u32 4, %s39
          %p263 = scmp.lt.s32.totalorder %s262, 7
          %s264 = scalar_select %p263, %s262, 7
          %s265 = smul.addr %s264, 8
          %s266 = scalar_lea.vmem %s4, %s265
          %s267 = smul.u32 4, %s39
        $region28: #{tpu_custom_call.1} parent=15 // pred_fallthru
          _
        // Predicated region
        $region29: #{tpu_custom_call.1} parent=15 // pred_check
          %p268 = pneg %p159
        $region30: #{tpu_custom_call.1} parent=15 // pred_check_branch
          %270 = sbr.rel (%p268) target = $region32
        $region31: #{tpu_custom_call.1} parent=15 // pred_region
          %s271 = sand.u32 %s149, 1
          %s272 = scalar_lea.sflag [#allocation6], %s271
          %s273 = sand.u32 %s149, 1
          %s274 = smul.addr %s273, 128
          %s275 = scalar_lea.vmem [#allocation5], %s274
          %s276 = smul.u32 %s39, 8
          %s277 = sadd.s32 %s276, %s41
          %s278 = sld [smem:[#allocation3 + %s277]]
          %280 = vsyncadd %s272, 0
          %s281 = smul.addr %s278, 32
          %s282 = sadd.s32 %s40, %s281
          %s283 = smul.addr %s282, 8
          %s284 = scalar_lea.hbm %s5, %s283
          %s285 = sshll.u32 %s284, 4
          %s286 = int_to_ptr.hbm [resolvable:$true] %s285
          %s287 = sshll.u32 %s275, 4
          %s288 = int_to_ptr.vmem [resolvable:$true] %s287
          %293 = dma.hbm_to_vmem [thread:$0]  %s286, 2048, %s288, %s272, 256, 128, 8
        $region32: #{tpu_custom_call.1} parent=15 // pred_fallthru
          _
        // Predicated region
        $region33: #{tpu_custom_call.1} parent=15 // pred_check
          %p294 = pneg %p185
        $region34: #{tpu_custom_call.1} parent=15 // pred_check_branch
          %296 = sbr.rel (%p294) target = $region36
        $region35: #{tpu_custom_call.1} parent=15 // pred_region
          %p297 = scmp.lt.s32.totalorder %s40, 1
          %s298 = scalar_select %p297, %s40, 1
          %s299 = smul.addr %s298, 8
          %s300 = scalar_lea.vmem %s6, %s299
        $region36: #{tpu_custom_call.1} parent=15 // pred_fallthru
          _
      $region16: #{tpu_custom_call.1} parent=5 // pred_fallthru
        _
      %p301 = scmp.le.s32.totalorder 1, %s32
      %p302 = scmp.lt.s32.totalorder %s32, 33
      %p303 = pnand %p301, %p302
      %p304 = pneg %p303
      // Predicated region
      $region37: #{tpu_custom_call.1} parent=5 // pred_check
        _
      $region38: #{tpu_custom_call.1} parent=5 // pred_check_branch
        %306 = sbr.rel (%p303) target = $region40
      $region39: #{tpu_custom_call.1} parent=5 // pred_region
        %s307 = ssub.s32 %s32, 1
        %s308 = sand.u32 %s152, 1
        %s309 = scalar_lea.sflag [#allocation6], %s308
        %s310 = sand.u32 %s152, 1
        %s311 = smul.addr %s310, 128
        %s312 = scalar_lea.vmem [#allocation5], %s311
        // Predicated region
        $region41: #{tpu_custom_call.1} parent=39 // pred_check
          %p313 = pneg %p165
        $region42: #{tpu_custom_call.1} parent=39 // pred_check_branch
          %315 = sbr.rel (%p313) target = $region44
        $region43: #{tpu_custom_call.1} parent=39 // pred_region
          %317 = dma.done %s309, 2048
        $region44: #{tpu_custom_call.1} parent=39 // pred_fallthru
          _
        %s318 = smul.u32 4, %s42
        %p319 = scmp.lt.s32.totalorder %s318, 7
        %s320 = scalar_select %p319, %s318, 7
        %s321 = smul.addr %s320, 8
        %s322 = scalar_lea.vmem %s2, %s321
        %p323 = pneg %p77
        %p324 = pneg %p74
        %p325 = scmp.lt.s32.totalorder %s42, 1
        %s326 = scalar_select %p325, %s42, 1
        %p327 = scmp.lt.s32.totalorder %s44, 7
        %s328 = scalar_select %p327, %s44, 7
        %s329 = smul.addr %s328, 4
        %s330 = smul.addr %s326, 32
        %s331 = sadd.s32 %s329, %s330
        %s332 = smul.addr %s331, 8
        %s333 = scalar_lea.vmem %s3, %s332
        %p334 = pneg %p105
        %p335 = pneg %p102
        %s336 = smul.u32 4, %s42
        %p337 = scmp.lt.s32.totalorder %s336, 7
        %s338 = scalar_select %p337, %s336, 7
        %s339 = smul.addr %s338, 8
        %s340 = scalar_lea.vmem %s4, %s339
        %p341 = pneg %p131
        %p342 = pneg %p128
        %s343 = sand.u32 %s152, 1
        %s344 = scalar_lea.sflag [#allocation6], %s343
        %s345 = sand.u32 %s152, 1
        %s346 = smul.addr %s345, 128
        %s347 = scalar_lea.vmem [#allocation5], %s346
        %p348 = pneg %p165
        %p349 = pneg %p162
        %p350 = scmp.lt.s32.totalorder %s43, 1
        %s351 = scalar_select %p350, %s43, 1
        %s352 = smul.addr %s351, 8
        %s353 = scalar_lea.vmem %s6, %s352
        %p354 = pneg %p191
        %p355 = pneg %p188
        %p356 = pneg %p219
        %p357 = pneg %p216
        %s358 = sand.u32 %s206, 1
        %s359 = scalar_lea.sflag [#allocation7], %s358
        %s360 = sand.u32 %s206, 1
        %s361 = smul.addr %s360, 32
        %s362 = scalar_lea.vmem [#allocation8], %s361
        %s363 = smul.u32 4, %s42
        %p364 = scmp.lt.s32.totalorder %s363, 7
        %s365 = scalar_select %p364, %s363, 7
        %s366 = smul.addr %s365, 8
        %s367 = scalar_lea.vmem %s2, %s366
        %s368 = smul.u32 4, %s42
        %p369 = scmp.lt.s32.totalorder %s42, 1
        %s370 = scalar_select %p369, %s42, 1
        %p371 = scmp.lt.s32.totalorder %s44, 7
        %s372 = scalar_select %p371, %s44, 7
        %s373 = smul.addr %s372, 4
        %s374 = smul.addr %s370, 32
        %s375 = sadd.s32 %s373, %s374
        %s376 = smul.addr %s375, 8
        %s377 = scalar_lea.vmem %s3, %s376
        %s378 = smul.u32 4, %s42
        %p379 = scmp.lt.s32.totalorder %s378, 7
        %s380 = scalar_select %p379, %s378, 7
        %s381 = smul.addr %s380, 8
        %s382 = scalar_lea.vmem %s4, %s381
        %s383 = smul.u32 4, %s42
        %s384 = smul.u32 %s42, 8
        %s385 = sadd.s32 %s384, %s44
        %s386 = sld [smem:[#allocation3 + %s385]]
        %p387 = scmp.lt.s32.totalorder %s43, 1
        %s388 = scalar_select %p387, %s43, 1
        %s389 = smul.addr %s388, 8
        %s390 = scalar_lea.vmem %s6, %s389
        %s391 = smul.u32 4, %s42
        %p392 = scmp.eq.s32.totalorder %s44, 0
        // Predicated region
        $region45: #{tpu_custom_call.1} parent=39 // pred_check
          %p393 = pneg %p392
        $region46: #{tpu_custom_call.1} parent=39 // pred_check_branch
          %395 = sbr.rel (%p393) target = $region48
        $region47: #{tpu_custom_call.1} parent=39 // pred_region
          %v396 = vld [vmem:[%s382] sm:$0xff]
          %v397 = vld [vmem:[%s382 + $0x8] sm:$0xff]
          %v398 = vld [vmem:[%s382 + $0x10] sm:$0xff]
          %v399 = vld [vmem:[%s382 + $0x18] sm:$0xff]
          %v400 = vld [vmem:[%s390] sm:$0xff]
          %vm401 = vcmask 64512
          %v403 = vsel %vm401, %v396, 0
          %v406 = vsel %vm401, %v397, 0
          %v409 = vsel %vm401, %v398, 0
          %v412 = vsel %vm401, %v399, 0
          %414 = vmatpush.msra.mxu0 0.0
          %415 = vmatpush.msra.mxu0 0.0
          %416 = vmatpush.msra.mxu0 0.0
          %417 = vmatpush.msra.mxu0 0.0
          %418 = vmatpush.msra.mxu0 0.0
          %419 = vmatpush.msra.mxu0 0.0
          %420 = vmatpush.msra.mxu0 0.0
          %421 = vmatpush.msra.mxu0 0.0
          %422 = vmatpush.msra.mxu0 0.0
          %423 = vmatpush.msra.mxu0 0.0
          %424 = vmatpush.msra.mxu0 0.0
          %425 = vmatpush.msra.mxu0 0.0
          %426 = vmatpush.msra.mxu0 0.0
          %427 = vmatpush.msra.mxu0 0.0
          %428 = vmatpush.msra.mxu0 0.0
          %429 = vmatpush.msra.mxu0 %v400
          %430 = vmatmul.f32.gmra.mxu0 %v403
          %v431 = vpop.f32.mrf.mxu0
          %v432 = vadd.f32 0.0, %v431
          %433 = vmatmul.f32.gmra.mxu0 %v406
          %v434 = vpop.f32.mrf.mxu0
          %v435 = vadd.f32 0.0, %v434
          %436 = vmatmul.f32.gmra.mxu0 %v409
          %v437 = vpop.f32.mrf.mxu0
          %v438 = vadd.f32 0.0, %v437
          %439 = vmatmul.f32.gmra.mxu0 %v412
          %v440 = vpop.f32.mrf.mxu0
          %v441 = vadd.f32 0.0, %v440
          %442 = vdwg.mxu0
          %443 = vst [vmem:[%s362] sm:$0xff] %v432
          %444 = vst [vmem:[%s362 + $0x8] sm:$0xff] %v435
          %445 = vst [vmem:[%s362 + $0x10] sm:$0xff] %v438
          %446 = vst [vmem:[%s362 + $0x18] sm:$0xff] %v441
        $region48: #{tpu_custom_call.1} parent=39 // pred_fallthru
          _
        %s447 = sld [smem:[#allocation4 + %s42]]
        %p448 = scmp.lt.s32.totalorder %s44, %s447
        // Predicated region
        $region49: #{tpu_custom_call.1} parent=39 // pred_check
          %p449 = pneg %p448
        $region50: #{tpu_custom_call.1} parent=39 // pred_check_branch
          %451 = sbr.rel (%p449) target = $region52
        $region51: #{tpu_custom_call.1} parent=39 // pred_region
          %v452 = vld [vmem:[%s367] sm:$0xff]
          %v453 = vld [vmem:[%s367 + $0x8] sm:$0xff]
          %v454 = vld [vmem:[%s367 + $0x10] sm:$0xff]
          %v455 = vld [vmem:[%s367 + $0x18] sm:$0xff]
          %v456 = vld [vmem:[%s312] sm:$0xff]
          %v457 = vld [vmem:[%s312 + $0x8] sm:$0xff]
          %v458 = vld [vmem:[%s312 + $0x10] sm:$0xff]
          %v459 = vld [vmem:[%s312 + $0x18] sm:$0xff]
          %v460 = vld [vmem:[%s312 + $0x20] sm:$0xff]
          %v461 = vld [vmem:[%s312 + $0x28] sm:$0xff]
          %v462 = vld [vmem:[%s312 + $0x30] sm:$0xff]
          %v463 = vld [vmem:[%s312 + $0x38] sm:$0xff]
          %v464 = vld [vmem:[%s312 + $0x40] sm:$0xff]
          %v465 = vld [vmem:[%s312 + $0x48] sm:$0xff]
          %v466 = vld [vmem:[%s312 + $0x50] sm:$0xff]
          %v467 = vld [vmem:[%s312 + $0x58] sm:$0xff]
          %v468 = vld [vmem:[%s312 + $0x60] sm:$0xff]
          %v469 = vld [vmem:[%s312 + $0x68] sm:$0xff]
          %v470 = vld [vmem:[%s312 + $0x70] sm:$0xff]
          %v471 = vld [vmem:[%s312 + $0x78] sm:$0xff]
          %472 = vmatpush.msra.mxu0 %v471
          %473 = vmatpush.msra.mxu0 %v470
          %474 = vmatpush.msra.mxu0 %v469
          %475 = vmatpush.msra.mxu0 %v468
          %476 = vmatpush.msra.mxu0 %v467
          %477 = vmatpush.msra.mxu0 %v466
          %478 = vmatpush.msra.mxu0 %v465
          %479 = vmatpush.msra.mxu0 %v464
          %480 = vmatpush.msra.mxu0 %v463
          %481 = vmatpush.msra.mxu0 %v462
          %482 = vmatpush.msra.mxu0 %v461
          %483 = vmatpush.msra.mxu0 %v460
          %484 = vmatpush.msra.mxu0 %v459
          %485 = vmatpush.msra.mxu0 %v458
          %486 = vmatpush.msra.mxu0 %v457
          %487 = vmatpush.msra.mxu0 %v456
          %488 = vmatmul.f32.gmra.mxu0 %v452
          %v489 = vpop.f32.mrf.mxu0
          %v490 = vadd.f32 0.0, %v489
          %491 = vmatmul.f32.gmra.mxu0 %v453
          %v492 = vpop.f32.mrf.mxu0
          %v493 = vadd.f32 0.0, %v492
          %494 = vmatmul.f32.gmra.mxu0 %v454
          %v495 = vpop.f32.mrf.mxu0
          %v496 = vadd.f32 0.0, %v495
          %497 = vmatmul.f32.gmra.mxu0 %v455
          %v498 = vpop.f32.mrf.mxu0
          %v499 = vadd.f32 0.0, %v498
          %500 = vdwg.mxu0
          %v501 = vld [vmem:[%s362] sm:$0xff]
          %v502 = vld [vmem:[%s362 + $0x8] sm:$0xff]
          %v503 = vld [vmem:[%s362 + $0x10] sm:$0xff]
          %v504 = vld [vmem:[%s362 + $0x18] sm:$0xff]
          %v505 = vld [vmem:[%s377] sm:$0xff]
          %v506 = vld [vmem:[%s377 + $0x8] sm:$0xff]
          %v507 = vld [vmem:[%s377 + $0x10] sm:$0xff]
          %v508 = vld [vmem:[%s377 + $0x18] sm:$0xff]
          %510 = vset.pattern.permute.xlu0 0
          %511 = vperm.xlu0 %510, %v505
          %v512 = vpop.permute.xlu0 %511
          %515 = vset.pattern.permute.xlu0 0
          %516 = vperm.xlu0 %515, %v506
          %v517 = vpop.permute.xlu0 %516
          %520 = vset.pattern.permute.xlu0 0
          %521 = vperm.xlu0 %520, %v507
          %v522 = vpop.permute.xlu0 %521
          %525 = vset.pattern.permute.xlu0 0
          %526 = vperm.xlu0 %525, %v508
          %v527 = vpop.permute.xlu0 %526
          %v529 = vmul.f32 %v512, %v490
          %v530 = vmul.f32 %v517, %v493
          %v531 = vmul.f32 %v522, %v496
          %v532 = vmul.f32 %v527, %v499
          %v533 = vadd.f32 %v501, %v529
          %v534 = vadd.f32 %v502, %v530
          %v535 = vadd.f32 %v503, %v531
          %v536 = vadd.f32 %v504, %v532
          %537 = vst [vmem:[%s362] sm:$0xff] %v533
          %538 = vst [vmem:[%s362 + $0x8] sm:$0xff] %v534
          %539 = vst [vmem:[%s362 + $0x10] sm:$0xff] %v535
          %540 = vst [vmem:[%s362 + $0x18] sm:$0xff] %v536
        $region52: #{tpu_custom_call.1} parent=39 // pred_fallthru
          _
        %s541 = sand.u32 %s206, 1
        %s542 = scalar_lea.sflag [#allocation7], %s541
        %s543 = sand.u32 %s206, 1
        %s544 = smul.addr %s543, 32
        %s545 = scalar_lea.vmem [#allocation8], %s544
        // Predicated region
        $region53: #{tpu_custom_call.1} parent=39 // pred_check
          %p546 = pneg %p216
        $region54: #{tpu_custom_call.1} parent=39 // pred_check_branch
          %548 = sbr.rel (%p546) target = $region56
        $region55: #{tpu_custom_call.1} parent=39 // pred_region
          %s549 = smul.u32 4, %s42
          %551 = vsyncadd %s542, 0
          %s552 = smul.addr %s549, 2
          %s553 = sadd.s32 %s43, %s552
          %s554 = smul.addr %s553, 8
          %s555 = scalar_lea.hbm %s7, %s554
          %s556 = sshll.u32 %s545, 4
          %s557 = int_to_ptr.vmem [resolvable:$true] %s556
          %s558 = sshll.u32 %s555, 4
          %s559 = int_to_ptr.hbm [resolvable:$true] %s558
          %564 = dma.vmem_to_hbm [thread:$0]  %s557, 512, %s559, %s542, 128, 256, 8
        $region56: #{tpu_custom_call.1} parent=39 // pred_fallthru
          _
      $region40: #{tpu_custom_call.1} parent=5 // pred_fallthru
        _
      %p565 = scmp.le.s32.totalorder 2, %s32
      // Predicated region
      $region57: #{tpu_custom_call.1} parent=5 // pred_check
        %p566 = pneg %p565
      $region58: #{tpu_custom_call.1} parent=5 // pred_check_branch
        %568 = sbr.rel (%p566) target = $region60
      $region59: #{tpu_custom_call.1} parent=5 // pred_region
        %s569 = ssub.s32 %s32, 2
        // Predicated region
        $region61: #{tpu_custom_call.1} parent=59 // pred_check
          %p570 = pneg %p222
        $region62: #{tpu_custom_call.1} parent=59 // pred_check_branch
          %572 = sbr.rel (%p570) target = $region64
        $region63: #{tpu_custom_call.1} parent=59 // pred_region
          %s573 = sand.u32 %s207, 1
          %s574 = scalar_lea.sflag [#allocation7], %s573
          %s575 = sand.u32 %s207, 1
          %s576 = smul.addr %s575, 32
          %s577 = scalar_lea.vmem [#allocation8], %s576
          %579 = dma.done %s574, 512
        $region64: #{tpu_custom_call.1} parent=59 // pred_fallthru
          _
      $region60: #{tpu_custom_call.1} parent=5 // pred_fallthru
        _
    $region6: #{tpu_custom_call.1} parent=1 // loop_footer
      %s36 = sadd.s32 1, %s32
    $region7: #{tpu_custom_call.1} parent=1 // loop_footer_branch
      %31 = sbr.rel target = $region3
    $region8: #{tpu_custom_call.1} parent=1 // loop_exit
      _
    %580 = vsyncpa [#allocation6], 1
    %s581 = scalar_lea.sflag [#allocation6], 1
    %582 = vsyncpa %s581, 1
    %583 = vsyncpa [#allocation7], 1
    %s584 = scalar_lea.sflag [#allocation7], 1
    %585 = vsyncpa %s584, 1

</llo_original>
